<compile_context>
chip_gen: v5e
topology: v5e:2x2
jax: 0.10.0
libtpu: 0.0.40
codegen_flags: <defaults>
</compile_context>

<pallas_src>
import functools
import math

import jax
import jax.numpy as jnp
from jax.experimental import pallas as pl
from jax.experimental.pallas import tpu as pltpu


def _rmsnorm_kernel(x_ref, w_ref, o_ref, *, eps, scale_in_input_dtype):
    # x_ref: (tile_rows, dim) input dtype; w_ref: (1, dim) native dtype.
    x = x_ref[...]
    xf = x.astype(jnp.float32)
    # Mean of squares accumulated in f32 (XLU cross-lane reduce), rsqrt on EUP.
    ms = jnp.mean(xf * xf, axis=-1, keepdims=True)
    rms = jax.lax.rsqrt(ms + eps)
    w = w_ref[...].astype(jnp.float32)          # cast once per step, tiny (1, dim)
    scale = rms * w                             # (tile_rows, dim) f32
    if scale_in_input_dtype:
        # bf16 output scaling (v6e/v7x): saves one full-tile f32 temporary.
        o_ref[...] = x * scale.astype(x.dtype)
    else:
        o_ref[...] = (xf * scale).astype(o_ref.dtype)


def _round_up(v, m):
    return ((v + m - 1) // m) * m


def _sublane_multiple(itemsize):
    # Packed-sublane multiple: f32 -> 8, bf16/f16 -> 16, int8/fp8 -> 32.
    return max(8, 32 // max(itemsize, 1))


def _chip_info():
    kind = ""
    try:
        kind = jax.devices()[0].device_kind.lower()
    except Exception:
        pass
    is_v7x = ("7" in kind)
    is_v5e = ("v5 lite" in kind) or ("v5e" in kind) or ("v5lite" in kind)
    try:
        vmem_cap = int(pltpu.get_tpu_info().vmem_capacity_bytes)
    except Exception:
        # Generation-aware fallback: 64 MiB/TC on v7x, 128 MiB on v5e/v6e.
        vmem_cap = (64 << 20) if is_v7x else (128 << 20)
    return is_v5e, is_v7x, vmem_cap


def _pick_tile_rows(rows, dim, in_itemsize, vmem_cap, is_v5e, is_v7x):
    """Byte-targeted tile_rows, rounded to the packed sublane multiple."""
    sub = _sublane_multiple(in_itemsize)
    rows_r = _round_up(max(rows, 1), sub)

    # Target bytes per I/O buffer (per grid step), sized so the ~0.35 us/step
    # overhead stays <~10% of the step's HBM transfer time on each generation.
    if is_v7x:
        target_bytes = 5 << 20          # ~3.2 TB/s HBM per TC
    elif is_v5e:
        target_bytes = (3 << 20) // 2   # 1.5 MiB, ~0.8 TB/s HBM
    else:
        target_bytes = (5 << 20) // 2   # 2.5 MiB, ~1.4 TB/s HBM (v6e / default)

    row_io_bytes = dim * in_itemsize
    tile = max(sub, target_bytes // max(row_io_bytes, 1))

    # Clamp by VMEM: double-buffered in+out tiles plus ~2 full-tile f32 temps.
    budget = int(vmem_cap * 0.6)
    bytes_per_row = dim * (4 * in_itemsize + 2 * 4)
    tile = min(tile, max(sub, budget // max(bytes_per_row, 1)))

    tile = max(sub, (tile // sub) * sub)
    tile = min(tile, rows_r)

    if is_v7x:
        # Two TensorCores: keep >= ~8 grid steps when there is enough work so
        # the "parallel" row axis can shard evenly across both cores.
        if rows_r >= 8 * sub:
            tile = min(tile, max(sub, (rows_r // 8 // sub) * sub))
        # Prefer an even number of steps for 2-way balance.
        grid = -(-rows // tile)
        if grid > 1 and grid % 2 == 1:
            alt = max(sub, _round_up(-(-rows_r // (grid + 1)), sub))
            if alt < tile and (-(-rows // alt)) % 2 == 0:
                tile = alt
    return tile


def rmsnorm(x, weight, eps=1e-6, *, tile_rows=None):
    """RMSNorm over the last axis of `x`, scaled by `weight` (shape [dim])."""
    orig_shape = x.shape
    dim = orig_shape[-1]
    rows = math.prod(orig_shape[:-1]) if len(orig_shape) > 1 else 1

    # NOTE: dim < 128 (or not a multiple of 128) hits masked partial stores —
    # acceptable degenerate/test path; real model dims are 128-aligned.
    x2d = x.reshape(rows, dim)
    w2d = weight.reshape(1, dim)   # native dtype; cast to f32 once in-kernel

    in_itemsize = jnp.dtype(x.dtype).itemsize
    is_v5e, is_v7x, vmem_cap = _chip_info()
    if tile_rows is None:
        tile_rows = _pick_tile_rows(rows, dim, in_itemsize, vmem_cap,
                                    is_v5e, is_v7x)

    grid_rows = pl.cdiv(rows, tile_rows)

    # bf16/f16 output scaling path on v6e/v7x only (v5e has no bf16 VALU).
    scale_in_input_dtype = (in_itemsize < 4) and (not is_v5e)

    # VMEM limit ~1.45x of the actual working set (double-buffered in+out
    # tiles + full-tile f32 temporaries + resident weight), no big floor,
    # clamped to chip capacity (64 MiB/TC on v7x).
    io_tile_bytes = tile_rows * dim * in_itemsize
    f32_tmp_bytes = (1 if scale_in_input_dtype else 2) * tile_rows * dim * 4
    f32_tmp_bytes += (io_tile_bytes if scale_in_input_dtype else 0)
    w_bytes = 2 * dim * (jnp.dtype(weight.dtype).itemsize + 4)
    vmem_needed = 4 * io_tile_bytes + f32_tmp_bytes + w_bytes
    vmem_limit = int(min(int(vmem_cap * 0.95),
                         max(int(vmem_needed * 1.45), 16 << 20)))

    out2d = pl.pallas_call(
        functools.partial(_rmsnorm_kernel, eps=eps,
                          scale_in_input_dtype=scale_in_input_dtype),
        out_shape=jax.ShapeDtypeStruct((rows, dim), x.dtype),
        grid_spec=pltpu.PrefetchScalarGridSpec(
            num_scalar_prefetch=0,
            grid=(grid_rows,),
            in_specs=[
                pl.BlockSpec((tile_rows, dim), lambda i: (i, 0)),
                pl.BlockSpec((1, dim), lambda i: (0, 0)),  # resident weight
            ],
            out_specs=pl.BlockSpec((tile_rows, dim), lambda i: (i, 0)),
        ),
        compiler_params=pltpu.CompilerParams(
            dimension_semantics=("parallel",),
            vmem_limit_bytes=vmem_limit,
        ),
    )(x2d, w2d)

    return out2d.reshape(orig_shape)


def rmsnorm_ref(x, weight, eps=1e-6):
    xf = x.astype(jnp.float32)
    rms = jax.lax.rsqrt(jnp.mean(xf * xf, axis=-1, keepdims=True) + eps)
    return (xf * rms * weight.astype(jnp.float32)).astype(x.dtype)


if __name__ == "__main__":
    key = jax.random.PRNGKey(0)
    eps = 1e-6
    k1, k2 = jax.random.split(key)

    # Test 1: small f32 case matching the PyTorch module's typical usage.
    batch, seq, hidden = 2, 8, 32
    x = jax.random.normal(k1, (batch, seq, hidden), dtype=jnp.float32)
    weight = jnp.ones((hidden,), dtype=jnp.float32)  # nn.Parameter(torch.ones(dim))
    out = jax.block_until_ready(rmsnorm(x, weight, eps=eps))
    ref = rmsnorm_ref(x, weight, eps=eps)
    assert out.shape == x.shape
    assert jnp.allclose(out, ref, atol=1e-5, rtol=1e-5), "f32 mismatch vs reference"

    # Test 2: bf16 I/O with a row count that is not a multiple of the tile,
    # exercising the cdiv grid / partial-boundary-block handling and the
    # bf16 output-scaling path (v6e/v7x).
    x2 = jax.random.normal(k2, (3, 5, 128), dtype=jnp.bfloat16)
    w2 = (1.0 + 0.1 * jnp.arange(128, dtype=jnp.float32)).astype(jnp.bfloat16)
    out2 = jax.block_until_ready(rmsnorm(x2, w2, eps=eps))
    ref2 = rmsnorm_ref(x2, w2, eps=eps)
    assert out2.shape == x2.shape
    assert jnp.allclose(out2.astype(jnp.float32), ref2.astype(jnp.float32),
                        atol=2e-2, rtol=2e-2), "bf16 mismatch vs reference"

    print("KERNEL_OK")
</pallas_src>

<mosaic_0001>
module attributes {stable_mosaic.version = 11 : i64} {
  func.func @_rmsnorm_kernel(%arg0: i32, %arg1: memref<16x32xf32, #tpu.memory_space<vmem>>, %arg2: memref<1x32xf32, #tpu.memory_space<vmem>>, %arg3: memref<16x32xf32, #tpu.memory_space<vmem>>) attributes {dimension_semantics = [#tpu.dimension_semantics<parallel>], iteration_bounds = array<i64: 1>, scalar_prefetch = 0 : i64, scratch_operands = 0 : i64, tpu.core_type = #tpu.core_type<tc>, window_params = [{transform_indices = @transform_0, window_bounds = array<i64: 16, 32>}, {pipeline_mode = #tpu.pipeline_mode<synchronous>, transform_indices = @transform_1, window_bounds = array<i64: 1, 32>}, {transform_indices = @transform_2, window_bounds = array<i64: 16, 32>}]} {
    %c0 = arith.constant 0 : index
    %c0_0 = arith.constant 0 : index
    %0 = vector.load %arg1[%c0, %c0_0] : memref<16x32xf32, #tpu.memory_space<vmem>>, vector<16x32xf32>
    %1 = arith.mulf %0, %0 : vector<16x32xf32>
    %cst = arith.constant dense<0.000000e+00> : vector<16xf32>
    %2 = vector.multi_reduction <add>, %1, %cst [1] : vector<16x32xf32> to vector<16xf32>
    %3 = vector.shape_cast %2 : vector<16xf32> to vector<16x1xf32>
    %cst_1 = arith.constant 3.200000e+01 : f32
    %4 = vector.broadcast %cst_1 : f32 to vector<16x1xf32>
    %5 = arith.divf %3, %4 : vector<16x1xf32>
    %cst_2 = arith.constant 9.99999997E-7 : f32
    %6 = vector.broadcast %cst_2 : f32 to vector<16x1xf32>
    %7 = arith.addf %5, %6 : vector<16x1xf32>
    %8 = math.rsqrt %7 : vector<16x1xf32>
    %c0_3 = arith.constant 0 : index
    %c0_4 = arith.constant 0 : index
    %9 = vector.load %arg2[%c0_3, %c0_4] : memref<1x32xf32, #tpu.memory_space<vmem>>, vector<1x32xf32>
    %10 = vector.broadcast %8 : vector<16x1xf32> to vector<16x32xf32>
    %11 = vector.broadcast %9 : vector<1x32xf32> to vector<16x32xf32>
    %12 = arith.mulf %10, %11 : vector<16x32xf32>
    %13 = arith.mulf %0, %12 : vector<16x32xf32>
    %c0_5 = arith.constant 0 : index
    %c0_6 = arith.constant 0 : index
    %14 = vector.load %arg3[%c0_5, %c0_6] : memref<16x32xf32, #tpu.memory_space<vmem>>, vector<16x32xf32>
    tpu.vector_store %arg3[%c0_5, %c0_6], %13 {strides = array<i32>} : memref<16x32xf32, #tpu.memory_space<vmem>>, vector<16x32xf32>,
    return
  }
  func.func @transform_0(%arg0: i32) -> (i32, i32) {
    %c0_i32 = arith.constant 0 : i32
    %c0_i32_0 = arith.constant 0 : i32
    return %arg0, %c0_i32 : i32, i32
  }
  func.func @transform_1(%arg0: i32) -> (i32, i32) {
    %c0_i32 = arith.constant 0 : i32
    %c0_i32_0 = arith.constant 0 : i32
    %c0_i32_1 = arith.constant 0 : i32
    return %c0_i32, %c0_i32_0 : i32, i32
  }
  func.func @transform_2(%arg0: i32) -> (i32, i32) {
    %c0_i32 = arith.constant 0 : i32
    %c0_i32_0 = arith.constant 0 : i32
    return %arg0, %c0_i32 : i32, i32
  }
}

</mosaic_0001>

<llo_original>
// kernel: tpu_custom_call.1
$region0: #{tpu_custom_call.1}
  #allocation0 [shape = 'u32[]', space=smem, size = 0x4, offset = 0x4, fixed_abs, tag = 'smem constant byte address 0x4 - core index']
  #allocation1 [shape = 'u32[72,128]{1,0:T(1,128)}', space=vmem, size = 0x9000, scoped, tag = 'internal scratch']
  %s0 = inlined_call_operand.hbm [shape: f32[16,32], index: 0, kind: input, shape index: {}]
  %s1 = inlined_call_operand.hbm [shape: f32[1,32], index: 1, kind: input, shape index: {}]
  %s2 = inlined_call_operand.hbm [shape: f32[16,32], index: 2, kind: output, shape index: {}]
  %s3 = sld [smem:[#allocation0]]
  $region26: #{tpu_custom_call.1} parent=0
    _
  %s5 = ssub.s32 1, %s3
  %s6 = scalar_select 0, %s5, %s3
  $region1: #{tpu_custom_call.1} parent=0
    #allocation2 [shape = 'u8[8192]{0}', space=vmem, size = 0x2000, scoped, tag = 'input window, operand 0, single buffered']
    #allocation3 [shape = 's32[1]{0}', space=sflag, size = 0x4, scoped, tag = 'scoped memory for tpu_custom_call.1']
    #allocation4 [shape = 's32[1]{0}', space=sflag, size = 0x4, scoped, tag = 'scoped memory for tpu_custom_call.1']
    #allocation5 [shape = 'u8[512]{0}', space=vmem, size = 0x400, scoped, tag = 'input window, operand 1, single buffered']
    #allocation6 [shape = 's32[1]{0}', space=sflag, size = 0x4, scoped, tag = 'scoped memory for tpu_custom_call.1']
    #allocation7 [shape = 'u8[8192]{0}', space=vmem, size = 0x2000, scoped, tag = 'output window, operand 0, single buffered']
    %7 = vsyncpa [#allocation3], 0
    %8 = vsyncpa [#allocation6], 0
    %9 = vsyncpa [#allocation4], 0
    // Predicated region
    $region2: #{tpu_custom_call.1} parent=1 // pred_check
      _
    $region3: #{tpu_custom_call.1} parent=1 // pred_check_branch
      %11 = sbr.rel (0) target = $region5
    $region4: #{tpu_custom_call.1} parent=1 // pred_region
      %13 = vsyncadd [#allocation3], 0
      %s14 = sshll.u32 %s0, 4
      %s15 = int_to_ptr.hbm [resolvable:$true] %s14
      %s16 = sshll.u32 [#allocation2], 4
      %s17 = int_to_ptr.vmem [resolvable:$true] %s16
      %22 = dma.hbm_to_vmem [thread:$0]  %s15, 256, %s17, [#allocation3], 128, 128, 8
    $region5: #{tpu_custom_call.1} parent=1 // pred_fallthru
      _
    // Predicated region
    $region6: #{tpu_custom_call.1} parent=1 // pred_check
      _
    $region7: #{tpu_custom_call.1} parent=1 // pred_check_branch
      %24 = sbr.rel (0) target = $region9
    $region8: #{tpu_custom_call.1} parent=1 // pred_region
      %26 = vsyncadd [#allocation6], 0
      %s28 = sshll.u32 %s1, 4
      %s29 = int_to_ptr.hbm [resolvable:$true] %s28
      %s30 = sshll.u32 [#allocation5], 4
      %s31 = int_to_ptr.vmem [resolvable:$true] %s30
      %33 = dma.hbm_to_vmem [thread:$0]  %s29, 16, %s31, [#allocation6]
    $region9: #{tpu_custom_call.1} parent=1 // pred_fallthru
      _
    // Predicated region
    $region10: #{tpu_custom_call.1} parent=1 // pred_check
      _
    $region11: #{tpu_custom_call.1} parent=1 // pred_check_branch
      %35 = sbr.rel (0) target = $region13
    $region12: #{tpu_custom_call.1} parent=1 // pred_region
      %37 = dma.done [#allocation3], 256
    $region13: #{tpu_custom_call.1} parent=1 // pred_fallthru
      _
    // Predicated region
    $region14: #{tpu_custom_call.1} parent=1 // pred_check
      _
    $region15: #{tpu_custom_call.1} parent=1 // pred_check_branch
      %39 = sbr.rel (0) target = $region17
    $region16: #{tpu_custom_call.1} parent=1 // pred_region
      %41 = dma.done [#allocation6], 16
    $region17: #{tpu_custom_call.1} parent=1 // pred_fallthru
      _
    %v42 = vld [vmem:[#allocation2] sm:$0xff]
    %v43 = vld [vmem:[#allocation2 + $0x8] sm:$0xff]
    %v44 = vmul.f32 %v42, %v42
    %v45 = vmul.f32 %v43, %v43
    %vm46 = vcmask 261120
    %v47 = vsel %vm46, %v44, 0.0
    %48 = vadd.xlane.f32.xlu0 %v47
    %v49 = vpop.xlane.xlu0 %48
    %v50 = vsel %vm46, %v45, 0.0
    %51 = vadd.xlane.f32.xlu0 %v50
    %v52 = vpop.xlane.xlu0 %51
    %v53 = vrcp.pop 32.0
    %v54 = vmul.f32 32.0, %v53
    %v55 = vsub.f32 1.0, %v54
    %v56 = vmul.f32 %v53, %v55
    %v57 = vadd.f32 %v53, %v56
    %vm58 = vweird.f32 %v53
    %v59 = vsel %vm58, %v53, %v57
    %v60 = vmul.f32 %v49, %v59
    %v61 = vmul.f32 %v52, %v59
    %v62 = vadd.f32 %v60, 1e-06
    %v63 = vadd.f32 %v61, 1e-06
    %v64 = vrsqrt.pop %v62
    %v65 = vmul.f32 %v64, %v62
    %v66 = vmul.f32 %v65, %v64
    %v67 = vmul.f32 0.5, %v66
    %v68 = vsub.f32 1.5, %v67
    %v69 = vmul.f32 %v64, %v68
    %vm70 = vweird.f32 %v62
    %vm71 = vweird.f32 %v64
    %vm72 = vmor %vm70, %vm71
    %v73 = vsel %vm72, %v64, %v69
    %v74 = vrsqrt.pop %v63
    %v75 = vmul.f32 %v74, %v63
    %v76 = vmul.f32 %v75, %v74
    %v77 = vmul.f32 0.5, %v76
    %v78 = vsub.f32 1.5, %v77
    %v79 = vmul.f32 %v74, %v78
    %vm80 = vweird.f32 %v63
    %vm81 = vweird.f32 %v74
    %vm82 = vmor %vm80, %vm81
    %v83 = vsel %vm82, %v74, %v79
    %v84 = vld [vmem:[#allocation5] sm:$0x1]
    %v86 = vperm.slane %v84, 0
    %v88 = vmul.f32 %v73, %v86
    %v89 = vmul.f32 %v83, %v86
    %v90 = vmul.f32 %v42, %v88
    %v91 = vmul.f32 %v43, %v89
    %92 = vst.msk [vmem:[#allocation7] sm:$0xff] %vm46, %v90
    %93 = vst.msk [vmem:[#allocation7 + $0x8] sm:$0xff] %vm46, %v91
    // Predicated region
    $region18: #{tpu_custom_call.1} parent=1 // pred_check
      _
    $region19: #{tpu_custom_call.1} parent=1 // pred_check_branch
      %95 = sbr.rel (0) target = $region21
    $region20: #{tpu_custom_call.1} parent=1 // pred_region
      %97 = vsyncadd [#allocation4], 0
      %s98 = sshll.u32 [#allocation7], 4
      %s99 = int_to_ptr.vmem [resolvable:$true] %s98
      %s100 = sshll.u32 %s2, 4
      %s101 = int_to_ptr.hbm [resolvable:$true] %s100
      %106 = dma.vmem_to_hbm [thread:$0]  %s99, 256, %s101, [#allocation4], 128, 128, 8
    $region21: #{tpu_custom_call.1} parent=1 // pred_fallthru
      _
    // Predicated region
    $region22: #{tpu_custom_call.1} parent=1 // pred_check
      _
    $region23: #{tpu_custom_call.1} parent=1 // pred_check_branch
      %108 = sbr.rel (0) target = $region25
    $region24: #{tpu_custom_call.1} parent=1 // pred_region
      %110 = dma.done [#allocation4], 256
    $region25: #{tpu_custom_call.1} parent=1 // pred_fallthru
      _
    %111 = vsyncpa [#allocation3], 1
    %112 = vsyncpa [#allocation6], 1
    %113 = vsyncpa [#allocation4], 1

</llo_original>
